<compile_context>
chip_gen: v7x
topology: tpu7x:2x2x1
jax: 0.10.0
libtpu: 0.0.40
codegen_flags: <defaults>
</compile_context>

<pallas_src>
import jax
import jax.numpy as jnp
from jax.experimental import pallas as pl
from jax.experimental.pallas import tpu as pltpu


def _rpn_matmul_kernel(p_ref, w_ref, b_ref, o_ref):
    # p_ref: (TM, K)        im2col patch tile (K = 9*Cin on the lane axis)
    # w_ref: (K, Cout_pad)  folded conv weight, Cout zero-padded to lane width
    # b_ref: (1, Cout_pad)  zero-padded bias (f32)
    # o_ref: (TM, Cout_pad) lane-dense output tile
    acc = jnp.dot(p_ref[...], w_ref[...], preferred_element_type=jnp.float32)
    acc = acc + b_ref[...]                 # bias epilogue (VPU slot, free vs MXU)
    o_ref[...] = jnp.maximum(acc, 0.0).astype(o_ref.dtype)


def _round_up(x, m):
    return (x + m - 1) // m * m


def rpn_forward(x_nchw, weight_oihw, bias, *, compute_dtype=None):
    """Conv2d(Cin, Cout, k=3, s=1, p=1) + ReLU.  (N, Cin, H, W) -> (N, Cout, H, W)."""
    N, Cin, H, W = x_nchw.shape
    Cout, _, KH, KW = weight_oihw.shape
    K = KH * KW * Cin

    # ---- glue (plain JAX, outside the kernel) ------------------------------
    # TODO(synk): at production feature-map sizes keep the surrounding model
    # NHWC end-to-end so these transposes / pad are not extra HBM round trips.
    x_nhwc = jnp.transpose(x_nchw, (0, 2, 3, 1))
    x_pad = jnp.pad(x_nhwc, ((0, 0), (1, 1), (1, 1), (0, 0)))

    # im2col: (N*H*W, 9*Cin) patch slab, tap order (ky, kx, cin) matches the
    # HWIO-reshaped weight below.
    taps = [x_pad[:, ky:ky + H, kx:kx + W, :]
            for ky in range(KH) for kx in range(KW)]
    patches = jnp.concatenate(taps, axis=-1).reshape(N * H * W, K)

    # Weight OIHW -> HWIO -> (9*Cin, Cout); zero-pad Cout to full lane width.
    Cout_pad = _round_up(Cout, 128)
    w2 = jnp.transpose(weight_oihw, (2, 3, 1, 0)).reshape(K, Cout)
    w2 = jnp.pad(w2, ((0, 0), (0, Cout_pad - Cout)))
    b2 = jnp.pad(bias.astype(jnp.float32), (0, Cout_pad - Cout)).reshape(1, Cout_pad)

    # Optional bf16 MXU inputs (v6e/v7x); accumulation stays f32 in-kernel.
    if compute_dtype is not None:
        patches = patches.astype(compute_dtype)
        w2 = w2.astype(compute_dtype)

    # Fold batch into the matmul M dim; one grid step at small sizes,
    # 512-row "parallel" tiles at large sizes.
    M = N * H * W
    M8 = _round_up(M, 8)
    block_m = M8 if M8 <= 1024 else 512
    M_pad = _round_up(M, block_m)
    if M_pad != M:
        patches = jnp.pad(patches, ((0, M_pad - M), (0, 0)))

    out = pl.pallas_call(
        _rpn_matmul_kernel,
        out_shape=jax.ShapeDtypeStruct((M_pad, Cout_pad), x_nchw.dtype),
        grid=(M_pad // block_m,),
        in_specs=[
            pl.BlockSpec((block_m, K), lambda i: (i, 0)),
            pl.BlockSpec((K, Cout_pad), lambda i: (0, 0)),
            pl.BlockSpec((1, Cout_pad), lambda i: (0, 0)),
        ],
        out_specs=pl.BlockSpec((block_m, Cout_pad), lambda i: (i, 0)),
        compiler_params=pltpu.CompilerParams(
            dimension_semantics=("parallel",)
        ),
    )(patches, w2, b2)

    # Lane-dense (M, Cout_pad) slab -> NCHW (free layout plumbing).
    out = out[:M, :Cout].reshape(N, H, W, Cout)
    return jnp.transpose(out, (0, 3, 1, 2))


if __name__ == "__main__":
    # Small shapes consistent with the module: batch=2, in_channels=4,
    # out_channels=8, spatial 16x16.
    N, Cin, Cout, H, W = 2, 4, 8, 16, 16

    key = jax.random.PRNGKey(0)
    kx, kw, kb = jax.random.split(key, 3)

    x = jax.random.normal(kx, (N, Cin, H, W), dtype=jnp.float32)
    weight = 0.1 * jax.random.normal(kw, (Cout, Cin, 3, 3), dtype=jnp.float32)
    bias = 0.05 * jax.random.normal(kb, (Cout,), dtype=jnp.float32)

    out = rpn_forward(x, weight, bias)
    out = jax.block_until_ready(out)

    # Reference check with XLA conv (same semantics as torch Conv2d+ReLU).
    ref = jax.lax.conv_general_dilated(
        x, weight, window_strides=(1, 1), padding=((1, 1), (1, 1)),
        dimension_numbers=("NCHW", "OIHW", "NCHW"),
    ) + bias.reshape(1, Cout, 1, 1)
    ref = jnp.maximum(ref, 0.0)

    assert out.shape == (N, Cout, H, W)
    assert jnp.allclose(out, ref, atol=1e-4, rtol=1e-4)
    print("KERNEL_OK")
</pallas_src>

<mosaic_0001>
module attributes {stable_mosaic.version = 11 : i64} {
  func.func @_rpn_matmul_kernel(%arg0: i32, %arg1: memref<512x36xf32, #tpu.memory_space<vmem>>, %arg2: memref<36x128xf32, #tpu.memory_space<vmem>>, %arg3: memref<1x128xf32, #tpu.memory_space<vmem>>, %arg4: memref<512x128xf32, #tpu.memory_space<vmem>>) attributes {dimension_semantics = [#tpu.dimension_semantics<parallel>], iteration_bounds = array<i64: 1>, scalar_prefetch = 0 : i64, scratch_operands = 0 : i64, tpu.core_type = #tpu.core_type<tc>, window_params = [{transform_indices = @transform_0, window_bounds = array<i64: 512, 36>}, {pipeline_mode = #tpu.pipeline_mode<synchronous>, transform_indices = @transform_1, window_bounds = array<i64: 36, 128>}, {pipeline_mode = #tpu.pipeline_mode<synchronous>, transform_indices = @transform_2, window_bounds = array<i64: 1, 128>}, {transform_indices = @transform_3, window_bounds = array<i64: 512, 128>}]} {
    %c0 = arith.constant 0 : index
    %c0_0 = arith.constant 0 : index
    %0 = vector.load %arg1[%c0, %c0_0] : memref<512x36xf32, #tpu.memory_space<vmem>>, vector<512x36xf32>
    %c0_1 = arith.constant 0 : index
    %c0_2 = arith.constant 0 : index
    %1 = vector.load %arg2[%c0_1, %c0_2] : memref<36x128xf32, #tpu.memory_space<vmem>>, vector<36x128xf32>
    %cst = arith.constant dense<0.000000e+00> : vector<512x128xf32>
    %2 = tpu.matmul %0, %1, %cst {dimension_numbers = #tpu.dot_dimension_numbers<[1], [0], [0], [1], [0, 0, 1, 1], [], []>} : vector<512x36xf32>, vector<36x128xf32>, vector<512x128xf32> -> vector<512x128xf32>
    %c0_3 = arith.constant 0 : index
    %c0_4 = arith.constant 0 : index
    %3 = vector.load %arg3[%c0_3, %c0_4] : memref<1x128xf32, #tpu.memory_space<vmem>>, vector<1x128xf32>
    %4 = vector.broadcast %3 : vector<1x128xf32> to vector<512x128xf32>
    %5 = arith.addf %2, %4 : vector<512x128xf32>
    %cst_5 = arith.constant 0.000000e+00 : f32
    %6 = vector.broadcast %cst_5 : f32 to vector<512x128xf32>
    %7 = arith.maximumf %5, %6 : vector<512x128xf32>
    %c0_6 = arith.constant 0 : index
    %c0_7 = arith.constant 0 : index
    %8 = vector.load %arg4[%c0_6, %c0_7] : memref<512x128xf32, #tpu.memory_space<vmem>>, vector<512x128xf32>
    tpu.vector_store %arg4[%c0_6, %c0_7], %7 {strides = array<i32>} : memref<512x128xf32, #tpu.memory_space<vmem>>, vector<512x128xf32>,
    return
  }
  func.func @transform_0(%arg0: i32) -> (i32, i32) {
    %c0_i32 = arith.constant 0 : i32
    %c0_i32_0 = arith.constant 0 : i32
    return %arg0, %c0_i32 : i32, i32
  }
  func.func @transform_1(%arg0: i32) -> (i32, i32) {
    %c0_i32 = arith.constant 0 : i32
    %c0_i32_0 = arith.constant 0 : i32
    %c0_i32_1 = arith.constant 0 : i32
    return %c0_i32, %c0_i32_0 : i32, i32
  }
  func.func @transform_2(%arg0: i32) -> (i32, i32) {
    %c0_i32 = arith.constant 0 : i32
    %c0_i32_0 = arith.constant 0 : i32
    %c0_i32_1 = arith.constant 0 : i32
    return %c0_i32, %c0_i32_0 : i32, i32
  }
  func.func @transform_3(%arg0: i32) -> (i32, i32) {
    %c0_i32 = arith.constant 0 : i32
    %c0_i32_0 = arith.constant 0 : i32
    return %arg0, %c0_i32 : i32, i32
  }
}

</mosaic_0001>

<llo_original>
// kernel: tpu_custom_call.1
$region0: #{tpu_custom_call.1}
  #allocation0 [shape = 'u32[]', space=smem, size = 0x4, offset = 0x4, fixed_abs, tag = 'smem constant byte address 0x4 - core index']
  #allocation1 [shape = 'u32[144,128]{1,0:T(1,128)}', space=vmem, size = 0x12000, scoped, tag = 'internal scratch']
  %s0 = inlined_call_operand.vmem [shape: f32[512,36], index: 0, kind: input, shape index: {}]
  %s1 = inlined_call_operand.vmem [shape: f32[36,128], index: 1, kind: input, shape index: {}]
  %s2 = inlined_call_operand.vmem [shape: f32[1,128], index: 2, kind: input, shape index: {}]
  %s3 = inlined_call_operand.hbm [shape: f32[512,128], index: 3, kind: output, shape index: {}]
  %s4 = sld [smem:[#allocation0]]
  $region22: #{tpu_custom_call.1} parent=0
    _
  %s6 = ssub.s32 1, %s4
  %s7 = scalar_select 0, %s6, %s4
  $region1: #{tpu_custom_call.1} parent=0
    #allocation2 [shape = 'u8[262144]{0}', space=vmem, size = 0x40000, scoped, tag = 'output window, operand 0, single buffered']
    #allocation3 [shape = 's32[1]{0}', space=sflag, size = 0x4, scoped, tag = 'scoped memory for tpu_custom_call.1']
    %8 = vsyncpa [#allocation3], 0
    // Predicated region
    $region2: #{tpu_custom_call.1} parent=1 // pred_check
      _
    $region3: #{tpu_custom_call.1} parent=1 // pred_check_branch
      %10 = sbr.rel (0) target = $region5
    $region4: #{tpu_custom_call.1} parent=1 // pred_region
      _
    $region5: #{tpu_custom_call.1} parent=1 // pred_fallthru
      _
    // Predicated region
    $region6: #{tpu_custom_call.1} parent=1 // pred_check
      _
    $region7: #{tpu_custom_call.1} parent=1 // pred_check_branch
      %12 = sbr.rel (0) target = $region9
    $region8: #{tpu_custom_call.1} parent=1 // pred_region
      _
    $region9: #{tpu_custom_call.1} parent=1 // pred_fallthru
      _
    // Predicated region
    $region10: #{tpu_custom_call.1} parent=1 // pred_check
      _
    $region11: #{tpu_custom_call.1} parent=1 // pred_check_branch
      %14 = sbr.rel (0) target = $region13
    $region12: #{tpu_custom_call.1} parent=1 // pred_region
      _
    $region13: #{tpu_custom_call.1} parent=1 // pred_fallthru
      _
    %v15 = vld [vmem:[%s0] sm:$0xff]
    %v16 = vld [vmem:[%s0 + $0x8] sm:$0xff]
    %v17 = vld [vmem:[%s0 + $0x10] sm:$0xff]
    %v18 = vld [vmem:[%s0 + $0x18] sm:$0xff]
    %v19 = vld [vmem:[%s0 + $0x20] sm:$0xff]
    %v20 = vld [vmem:[%s0 + $0x28] sm:$0xff]
    %v21 = vld [vmem:[%s0 + $0x30] sm:$0xff]
    %v22 = vld [vmem:[%s0 + $0x38] sm:$0xff]
    %v23 = vld [vmem:[%s0 + $0x40] sm:$0xff]
    %v24 = vld [vmem:[%s0 + $0x48] sm:$0xff]
    %v25 = vld [vmem:[%s0 + $0x50] sm:$0xff]
    %v26 = vld [vmem:[%s0 + $0x58] sm:$0xff]
    %v27 = vld [vmem:[%s0 + $0x60] sm:$0xff]
    %v28 = vld [vmem:[%s0 + $0x68] sm:$0xff]
    %v29 = vld [vmem:[%s0 + $0x70] sm:$0xff]
    %v30 = vld [vmem:[%s0 + $0x78] sm:$0xff]
    %v31 = vld [vmem:[%s0 + $0x80] sm:$0xff]
    %v32 = vld [vmem:[%s0 + $0x88] sm:$0xff]
    %v33 = vld [vmem:[%s0 + $0x90] sm:$0xff]
    %v34 = vld [vmem:[%s0 + $0x98] sm:$0xff]
    %v35 = vld [vmem:[%s0 + $0xa0] sm:$0xff]
    %v36 = vld [vmem:[%s0 + $0xa8] sm:$0xff]
    %v37 = vld [vmem:[%s0 + $0xb0] sm:$0xff]
    %v38 = vld [vmem:[%s0 + $0xb8] sm:$0xff]
    %v39 = vld [vmem:[%s0 + $0xc0] sm:$0xff]
    %v40 = vld [vmem:[%s0 + $0xc8] sm:$0xff]
    %v41 = vld [vmem:[%s0 + $0xd0] sm:$0xff]
    %v42 = vld [vmem:[%s0 + $0xd8] sm:$0xff]
    %v43 = vld [vmem:[%s0 + $0xe0] sm:$0xff]
    %v44 = vld [vmem:[%s0 + $0xe8] sm:$0xff]
    %v45 = vld [vmem:[%s0 + $0xf0] sm:$0xff]
    %v46 = vld [vmem:[%s0 + $0xf8] sm:$0xff]
    %v47 = vld [vmem:[%s0 + $0x100] sm:$0xff]
    %v48 = vld [vmem:[%s0 + $0x108] sm:$0xff]
    %v49 = vld [vmem:[%s0 + $0x110] sm:$0xff]
    %v50 = vld [vmem:[%s0 + $0x118] sm:$0xff]
    %v51 = vld [vmem:[%s0 + $0x120] sm:$0xff]
    %v52 = vld [vmem:[%s0 + $0x128] sm:$0xff]
    %v53 = vld [vmem:[%s0 + $0x130] sm:$0xff]
    %v54 = vld [vmem:[%s0 + $0x138] sm:$0xff]
    %v55 = vld [vmem:[%s0 + $0x140] sm:$0xff]
    %v56 = vld [vmem:[%s0 + $0x148] sm:$0xff]
    %v57 = vld [vmem:[%s0 + $0x150] sm:$0xff]
    %v58 = vld [vmem:[%s0 + $0x158] sm:$0xff]
    %v59 = vld [vmem:[%s0 + $0x160] sm:$0xff]
    %v60 = vld [vmem:[%s0 + $0x168] sm:$0xff]
    %v61 = vld [vmem:[%s0 + $0x170] sm:$0xff]
    %v62 = vld [vmem:[%s0 + $0x178] sm:$0xff]
    %v63 = vld [vmem:[%s0 + $0x180] sm:$0xff]
    %v64 = vld [vmem:[%s0 + $0x188] sm:$0xff]
    %v65 = vld [vmem:[%s0 + $0x190] sm:$0xff]
    %v66 = vld [vmem:[%s0 + $0x198] sm:$0xff]
    %v67 = vld [vmem:[%s0 + $0x1a0] sm:$0xff]
    %v68 = vld [vmem:[%s0 + $0x1a8] sm:$0xff]
    %v69 = vld [vmem:[%s0 + $0x1b0] sm:$0xff]
    %v70 = vld [vmem:[%s0 + $0x1b8] sm:$0xff]
    %v71 = vld [vmem:[%s0 + $0x1c0] sm:$0xff]
    %v72 = vld [vmem:[%s0 + $0x1c8] sm:$0xff]
    %v73 = vld [vmem:[%s0 + $0x1d0] sm:$0xff]
    %v74 = vld [vmem:[%s0 + $0x1d8] sm:$0xff]
    %v75 = vld [vmem:[%s0 + $0x1e0] sm:$0xff]
    %v76 = vld [vmem:[%s0 + $0x1e8] sm:$0xff]
    %v77 = vld [vmem:[%s0 + $0x1f0] sm:$0xff]
    %v78 = vld [vmem:[%s0 + $0x1f8] sm:$0xff]
    %v79 = vld [vmem:[%s1] sm:$0xff]
    %v80 = vld [vmem:[%s1 + $0x8] sm:$0xff]
    %v81 = vld [vmem:[%s1 + $0x10] sm:$0xff]
    %v82 = vld [vmem:[%s1 + $0x18] sm:$0xff]
    %v83 = vld [vmem:[%s1 + $0x20] sm:$0xf]
    %v84 = vld [vmem:[%s2] sm:$0x1]
    %v86 = vlaneseq
    %v87 = vshrl.u32 %v86, 7
    %v88 = vsub.s32 0, %v87
    %v89 = vrot.slane %v84, %v88
    %vm91 = vcmask 293888
    %v93 = vsel %vm91, %v15, 0
    %v96 = vsel %vm91, %v16, 0
    %v99 = vsel %vm91, %v17, 0
    %v102 = vsel %vm91, %v18, 0
    %v105 = vsel %vm91, %v19, 0
    %v108 = vsel %vm91, %v20, 0
    %v111 = vsel %vm91, %v21, 0
    %v114 = vsel %vm91, %v22, 0
    %v117 = vsel %vm91, %v23, 0
    %v120 = vsel %vm91, %v24, 0
    %v123 = vsel %vm91, %v25, 0
    %v126 = vsel %vm91, %v26, 0
    %v129 = vsel %vm91, %v27, 0
    %v132 = vsel %vm91, %v28, 0
    %v135 = vsel %vm91, %v29, 0
    %v138 = vsel %vm91, %v30, 0
    %v141 = vsel %vm91, %v31, 0
    %v144 = vsel %vm91, %v32, 0
    %v147 = vsel %vm91, %v33, 0
    %v150 = vsel %vm91, %v34, 0
    %v153 = vsel %vm91, %v35, 0
    %v156 = vsel %vm91, %v36, 0
    %v159 = vsel %vm91, %v37, 0
    %v162 = vsel %vm91, %v38, 0
    %v165 = vsel %vm91, %v39, 0
    %v168 = vsel %vm91, %v40, 0
    %v171 = vsel %vm91, %v41, 0
    %v174 = vsel %vm91, %v42, 0
    %v177 = vsel %vm91, %v43, 0
    %v180 = vsel %vm91, %v44, 0
    %v183 = vsel %vm91, %v45, 0
    %v186 = vsel %vm91, %v46, 0
    %v189 = vsel %vm91, %v47, 0
    %v192 = vsel %vm91, %v48, 0
    %v195 = vsel %vm91, %v49, 0
    %v198 = vsel %vm91, %v50, 0
    %v201 = vsel %vm91, %v51, 0
    %v204 = vsel %vm91, %v52, 0
    %v207 = vsel %vm91, %v53, 0
    %v210 = vsel %vm91, %v54, 0
    %v213 = vsel %vm91, %v55, 0
    %v216 = vsel %vm91, %v56, 0
    %v219 = vsel %vm91, %v57, 0
    %v222 = vsel %vm91, %v58, 0
    %v225 = vsel %vm91, %v59, 0
    %v228 = vsel %vm91, %v60, 0
    %v231 = vsel %vm91, %v61, 0
    %v234 = vsel %vm91, %v62, 0
    %v237 = vsel %vm91, %v63, 0
    %v240 = vsel %vm91, %v64, 0
    %v243 = vsel %vm91, %v65, 0
    %v246 = vsel %vm91, %v66, 0
    %v249 = vsel %vm91, %v67, 0
    %v252 = vsel %vm91, %v68, 0
    %v255 = vsel %vm91, %v69, 0
    %v258 = vsel %vm91, %v70, 0
    %v261 = vsel %vm91, %v71, 0
    %v264 = vsel %vm91, %v72, 0
    %v267 = vsel %vm91, %v73, 0
    %v270 = vsel %vm91, %v74, 0
    %v273 = vsel %vm91, %v75, 0
    %v276 = vsel %vm91, %v76, 0
    %v279 = vsel %vm91, %v77, 0
    %v282 = vsel %vm91, %v78, 0
    %vm284 = vcmask 1043456
    %v286 = vsel %vm284, %v83, 0
    %288 = vmatprep.subr.mxu0 0.0
    %289 = vmatpush1.msra.mxu0 %v79
    %290 = vmatprep.subr.mxu0 0.0
    %291 = vmatpush1.msra.mxu0 %v80
    %292 = vmatprep.subr.mxu0 0.0
    %293 = vmatpush1.msra.mxu0 %v81
    %294 = vmatprep.subr.mxu0 0.0
    %295 = vmatpush1.msra.mxu0 %v82
    %296 = vmatprep.subr.mxu0 0.0
    %297 = vmatpush1.msra.mxu0 %v286
    %298 = vmatprep.subr.mxu0 0.0
    %299 = vmatpush1.msra.mxu0 0.0
    %300 = vmatprep.subr.mxu0 0.0
    %301 = vmatpush1.msra.mxu0 0.0
    %302 = vmatprep.subr.mxu0 0.0
    %303 = vmatpush1.msra.mxu0 0.0
    %304 = vmatprep.subr.mxu0 0.0
    %305 = vmatpush1.msra.mxu0 0.0
    %306 = vmatprep.subr.mxu0 0.0
    %307 = vmatpush1.msra.mxu0 0.0
    %308 = vmatprep.subr.mxu0 0.0
    %309 = vmatpush1.msra.mxu0 0.0
    %310 = vmatprep.subr.mxu0 0.0
    %311 = vmatpush1.msra.mxu0 0.0
    %312 = vmatprep.subr.mxu0 0.0
    %313 = vmatpush1.msra.mxu0 0.0
    %314 = vmatprep.subr.mxu0 0.0
    %315 = vmatpush1.msra.mxu0 0.0
    %316 = vmatprep.subr.mxu0 0.0
    %317 = vmatpush1.msra.mxu0 0.0
    %318 = vmatprep.subr.mxu0 0.0
    %319 = vmatpush1.msra.mxu0 0.0
    %320 = vmatprep.subr.mxu0 0.0
    %321 = vmatpush1.msra.mxu0 0.0
    %322 = vmatprep.subr.mxu0 0.0
    %323 = vmatpush1.msra.mxu0 0.0
    %324 = vmatprep.subr.mxu0 0.0
    %325 = vmatpush1.msra.mxu0 0.0
    %326 = vmatprep.subr.mxu0 0.0
    %327 = vmatpush1.msra.mxu0 0.0
    %328 = vmatprep.subr.mxu0 0.0
    %329 = vmatpush1.msra.mxu0 0.0
    %330 = vmatprep.subr.mxu0 0.0
    %331 = vmatpush1.msra.mxu0 0.0
    %332 = vmatprep.subr.mxu0 0.0
    %333 = vmatpush1.msra.mxu0 0.0
    %334 = vmatprep.subr.mxu0 0.0
    %335 = vmatpush1.msra.mxu0 0.0
    %336 = vmatprep.subr.mxu0 0.0
    %337 = vmatpush1.msra.mxu0 0.0
    %338 = vmatprep.subr.mxu0 0.0
    %339 = vmatpush1.msra.mxu0 0.0
    %340 = vmatprep.subr.mxu0 0.0
    %341 = vmatpush1.msra.mxu0 0.0
    %342 = vmatprep.subr.mxu0 0.0
    %343 = vmatpush1.msra.mxu0 0.0
    %344 = vmatprep.subr.mxu0 0.0
    %345 = vmatpush1.msra.mxu0 0.0
    %346 = vmatprep.subr.mxu0 0.0
    %347 = vmatpush1.msra.mxu0 0.0
    %348 = vmatprep.subr.mxu0 0.0
    %349 = vmatpush1.msra.mxu0 0.0
    %350 = vmatprep.subr.mxu0 0.0
    %351 = vmatpush1.msra.mxu0 0.0
    %352 = vmatprep.mubr.f32.mxu0 0.0
    %353 = vmatmul.mubr.f32.gmra.mrb[0].mxu0 %v93
    %v354 = vpop.f32.mrb[0].mxu0
    %v355 = vadd.f32 %v89, %v354
    %v356 = vpop.f32.mrb[0].mxu0
    %357 = vmatprep.mubr.f32.mxu0 0.0
    %358 = vmatmul.mubr.f32.gmra.mrb[0].mxu0 %v96
    %v359 = vpop.f32.mrb[0].mxu0
    %v360 = vadd.f32 %v89, %v359
    %v361 = vpop.f32.mrb[0].mxu0
    %362 = vmatprep.mubr.f32.mxu0 0.0
    %363 = vmatmul.mubr.f32.gmra.mrb[0].mxu0 %v99
    %v364 = vpop.f32.mrb[0].mxu0
    %v365 = vadd.f32 %v89, %v364
    %v366 = vpop.f32.mrb[0].mxu0
    %367 = vmatprep.mubr.f32.mxu0 0.0
    %368 = vmatmul.mubr.f32.gmra.mrb[0].mxu0 %v102
    %v369 = vpop.f32.mrb[0].mxu0
    %v370 = vadd.f32 %v89, %v369
    %v371 = vpop.f32.mrb[0].mxu0
    %372 = vmatprep.mubr.f32.mxu0 0.0
    %373 = vmatmul.mubr.f32.gmra.mrb[0].mxu0 %v105
    %v374 = vpop.f32.mrb[0].mxu0
    %v375 = vadd.f32 %v89, %v374
    %v376 = vpop.f32.mrb[0].mxu0
    %377 = vmatprep.mubr.f32.mxu0 0.0
    %378 = vmatmul.mubr.f32.gmra.mrb[0].mxu0 %v108
    %v379 = vpop.f32.mrb[0].mxu0
    %v380 = vadd.f32 %v89, %v379
    %v381 = vpop.f32.mrb[0].mxu0
    %382 = vmatprep.mubr.f32.mxu0 0.0
    %383 = vmatmul.mubr.f32.gmra.mrb[0].mxu0 %v111
    %v384 = vpop.f32.mrb[0].mxu0
    %v385 = vadd.f32 %v89, %v384
    %v386 = vpop.f32.mrb[0].mxu0
    %387 = vmatprep.mubr.f32.mxu0 0.0
    %388 = vmatmul.mubr.f32.gmra.mrb[0].mxu0 %v114
    %v389 = vpop.f32.mrb[0].mxu0
    %v390 = vadd.f32 %v89, %v389
    %v391 = vpop.f32.mrb[0].mxu0
    %392 = vmatprep.mubr.f32.mxu0 0.0
    %393 = vmatmul.mubr.f32.gmra.mrb[0].mxu0 %v117
    %v394 = vpop.f32.mrb[0].mxu0
    %v395 = vadd.f32 %v89, %v394
    %v396 = vpop.f32.mrb[0].mxu0
    %397 = vmatprep.mubr.f32.mxu0 0.0
    %398 = vmatmul.mubr.f32.gmra.mrb[0].mxu0 %v120
    %v399 = vpop.f32.mrb[0].mxu0
    %v400 = vadd.f32 %v89, %v399
    %v401 = vpop.f32.mrb[0].mxu0
    %402 = vmatprep.mubr.f32.mxu0 0.0
    %403 = vmatmul.mubr.f32.gmra.mrb[0].mxu0 %v123
    %v404 = vpop.f32.mrb[0].mxu0
    %v405 = vadd.f32 %v89, %v404
    %v406 = vpop.f32.mrb[0].mxu0
    %407 = vmatprep.mubr.f32.mxu0 0.0
    %408 = vmatmul.mubr.f32.gmra.mrb[0].mxu0 %v126
    %v409 = vpop.f32.mrb[0].mxu0
    %v410 = vadd.f32 %v89, %v409
    %v411 = vpop.f32.mrb[0].mxu0
    %412 = vmatprep.mubr.f32.mxu0 0.0
    %413 = vmatmul.mubr.f32.gmra.mrb[0].mxu0 %v129
    %v414 = vpop.f32.mrb[0].mxu0
    %v415 = vadd.f32 %v89, %v414
    %v416 = vpop.f32.mrb[0].mxu0
    %417 = vmatprep.mubr.f32.mxu0 0.0
    %418 = vmatmul.mubr.f32.gmra.mrb[0].mxu0 %v132
    %v419 = vpop.f32.mrb[0].mxu0
    %v420 = vadd.f32 %v89, %v419
    %v421 = vpop.f32.mrb[0].mxu0
    %422 = vmatprep.mubr.f32.mxu0 0.0
    %423 = vmatmul.mubr.f32.gmra.mrb[0].mxu0 %v135
    %v424 = vpop.f32.mrb[0].mxu0
    %v425 = vadd.f32 %v89, %v424
    %v426 = vpop.f32.mrb[0].mxu0
    %427 = vmatprep.mubr.f32.mxu0 0.0
    %428 = vmatmul.mubr.f32.gmra.mrb[0].mxu0 %v138
    %v429 = vpop.f32.mrb[0].mxu0
    %v430 = vadd.f32 %v89, %v429
    %v431 = vpop.f32.mrb[0].mxu0
    %432 = vmatprep.mubr.f32.mxu0 0.0
    %433 = vmatmul.mubr.f32.gmra.mrb[0].mxu0 %v141
    %v434 = vpop.f32.mrb[0].mxu0
    %v435 = vadd.f32 %v89, %v434
    %v436 = vpop.f32.mrb[0].mxu0
    %437 = vmatprep.mubr.f32.mxu0 0.0
    %438 = vmatmul.mubr.f32.gmra.mrb[0].mxu0 %v144
    %v439 = vpop.f32.mrb[0].mxu0
    %v440 = vadd.f32 %v89, %v439
    %v441 = vpop.f32.mrb[0].mxu0
    %442 = vmatprep.mubr.f32.mxu0 0.0
    %443 = vmatmul.mubr.f32.gmra.mrb[0].mxu0 %v147
    %v444 = vpop.f32.mrb[0].mxu0
    %v445 = vadd.f32 %v89, %v444
    %v446 = vpop.f32.mrb[0].mxu0
    %447 = vmatprep.mubr.f32.mxu0 0.0
    %448 = vmatmul.mubr.f32.gmra.mrb[0].mxu0 %v150
    %v449 = vpop.f32.mrb[0].mxu0
    %v450 = vadd.f32 %v89, %v449
    %v451 = vpop.f32.mrb[0].mxu0
    %452 = vmatprep.mubr.f32.mxu0 0.0
    %453 = vmatmul.mubr.f32.gmra.mrb[0].mxu0 %v153
    %v454 = vpop.f32.mrb[0].mxu0
    %v455 = vadd.f32 %v89, %v454
    %v456 = vpop.f32.mrb[0].mxu0
    %457 = vmatprep.mubr.f32.mxu0 0.0
    %458 = vmatmul.mubr.f32.gmra.mrb[0].mxu0 %v156
    %v459 = vpop.f32.mrb[0].mxu0
    %v460 = vadd.f32 %v89, %v459
    %v461 = vpop.f32.mrb[0].mxu0
    %462 = vmatprep.mubr.f32.mxu0 0.0
    %463 = vmatmul.mubr.f32.gmra.mrb[0].mxu0 %v159
    %v464 = vpop.f32.mrb[0].mxu0
    %v465 = vadd.f32 %v89, %v464
    %v466 = vpop.f32.mrb[0].mxu0
    %467 = vmatprep.mubr.f32.mxu0 0.0
    %468 = vmatmul.mubr.f32.gmra.mrb[0].mxu0 %v162
    %v469 = vpop.f32.mrb[0].mxu0
    %v470 = vadd.f32 %v89, %v469
    %v471 = vpop.f32.mrb[0].mxu0
    %472 = vmatprep.mubr.f32.mxu0 0.0
    %473 = vmatmul.mubr.f32.gmra.mrb[0].mxu0 %v165
    %v474 = vpop.f32.mrb[0].mxu0
    %v475 = vadd.f32 %v89, %v474
    %v476 = vpop.f32.mrb[0].mxu0
    %477 = vmatprep.mubr.f32.mxu0 0.0
    %478 = vmatmul.mubr.f32.gmra.mrb[0].mxu0 %v168
    %v479 = vpop.f32.mrb[0].mxu0
    %v480 = vadd.f32 %v89, %v479
    %v481 = vpop.f32.mrb[0].mxu0
    %482 = vmatprep.mubr.f32.mxu0 0.0
    %483 = vmatmul.mubr.f32.gmra.mrb[0].mxu0 %v171
    %v484 = vpop.f32.mrb[0].mxu0
    %v485 = vadd.f32 %v89, %v484
    %v486 = vpop.f32.mrb[0].mxu0
    %487 = vmatprep.mubr.f32.mxu0 0.0
    %488 = vmatmul.mubr.f32.gmra.mrb[0].mxu0 %v174
    %v489 = vpop.f32.mrb[0].mxu0
    %v490 = vadd.f32 %v89, %v489
    %v491 = vpop.f32.mrb[0].mxu0
    %492 = vmatprep.mubr.f32.mxu0 0.0
    %493 = vmatmul.mubr.f32.gmra.mrb[0].mxu0 %v177
    %v494 = vpop.f32.mrb[0].mxu0
    %v495 = vadd.f32 %v89, %v494
    %v496 = vpop.f32.mrb[0].mxu0
    %497 = vmatprep.mubr.f32.mxu0 0.0
    %498 = vmatmul.mubr.f32.gmra.mrb[0].mxu0 %v180
    %v499 = vpop.f32.mrb[0].mxu0
    %v500 = vadd.f32 %v89, %v499
    %v501 = vpop.f32.mrb[0].mxu0
    %502 = vmatprep.mubr.f32.mxu0 0.0
    %503 = vmatmul.mubr.f32.gmra.mrb[0].mxu0 %v183
    %v504 = vpop.f32.mrb[0].mxu0
    %v505 = vadd.f32 %v89, %v504
    %v506 = vpop.f32.mrb[0].mxu0
    %507 = vmatprep.mubr.f32.mxu0 0.0
    %508 = vmatmul.mubr.f32.gmra.mrb[0].mxu0 %v186
    %v509 = vpop.f32.mrb[0].mxu0
    %v510 = vadd.f32 %v89, %v509
    %v511 = vpop.f32.mrb[0].mxu0
    %512 = vmatprep.mubr.f32.mxu0 0.0
    %513 = vmatmul.mubr.f32.gmra.mrb[0].mxu0 %v189
    %v514 = vpop.f32.mrb[0].mxu0
    %v515 = vadd.f32 %v89, %v514
    %v516 = vpop.f32.mrb[0].mxu0
    %517 = vmatprep.mubr.f32.mxu0 0.0
    %518 = vmatmul.mubr.f32.gmra.mrb[0].mxu0 %v192
    %v519 = vpop.f32.mrb[0].mxu0
    %v520 = vadd.f32 %v89, %v519
    %v521 = vpop.f32.mrb[0].mxu0
    %522 = vmatprep.mubr.f32.mxu0 0.0
    %523 = vmatmul.mubr.f32.gmra.mrb[0].mxu0 %v195
    %v524 = vpop.f32.mrb[0].mxu0
    %v525 = vadd.f32 %v89, %v524
    %v526 = vpop.f32.mrb[0].mxu0
    %527 = vmatprep.mubr.f32.mxu0 0.0
    %528 = vmatmul.mubr.f32.gmra.mrb[0].mxu0 %v198
    %v529 = vpop.f32.mrb[0].mxu0
    %v530 = vadd.f32 %v89, %v529
    %v531 = vpop.f32.mrb[0].mxu0
    %532 = vmatprep.mubr.f32.mxu0 0.0
    %533 = vmatmul.mubr.f32.gmra.mrb[0].mxu0 %v201
    %v534 = vpop.f32.mrb[0].mxu0
    %v535 = vadd.f32 %v89, %v534
    %v536 = vpop.f32.mrb[0].mxu0
    %537 = vmatprep.mubr.f32.mxu0 0.0
    %538 = vmatmul.mubr.f32.gmra.mrb[0].mxu0 %v204
    %v539 = vpop.f32.mrb[0].mxu0
    %v540 = vadd.f32 %v89, %v539
    %v541 = vpop.f32.mrb[0].mxu0
    %542 = vmatprep.mubr.f32.mxu0 0.0
    %543 = vmatmul.mubr.f32.gmra.mrb[0].mxu0 %v207
    %v544 = vpop.f32.mrb[0].mxu0
    %v545 = vadd.f32 %v89, %v544
    %v546 = vpop.f32.mrb[0].mxu0
    %547 = vmatprep.mubr.f32.mxu0 0.0
    %548 = vmatmul.mubr.f32.gmra.mrb[0].mxu0 %v210
    %v549 = vpop.f32.mrb[0].mxu0
    %v550 = vadd.f32 %v89, %v549
    %v551 = vpop.f32.mrb[0].mxu0
    %552 = vmatprep.mubr.f32.mxu0 0.0
    %553 = vmatmul.mubr.f32.gmra.mrb[0].mxu0 %v213
    %v554 = vpop.f32.mrb[0].mxu0
    %v555 = vadd.f32 %v89, %v554
    %v556 = vpop.f32.mrb[0].mxu0
    %557 = vmatprep.mubr.f32.mxu0 0.0
    %558 = vmatmul.mubr.f32.gmra.mrb[0].mxu0 %v216
    %v559 = vpop.f32.mrb[0].mxu0
    %v560 = vadd.f32 %v89, %v559
    %v561 = vpop.f32.mrb[0].mxu0
    %562 = vmatprep.mubr.f32.mxu0 0.0
    %563 = vmatmul.mubr.f32.gmra.mrb[0].mxu0 %v219
    %v564 = vpop.f32.mrb[0].mxu0
    %v565 = vadd.f32 %v89, %v564
    %v566 = vpop.f32.mrb[0].mxu0
    %567 = vmatprep.mubr.f32.mxu0 0.0
    %568 = vmatmul.mubr.f32.gmra.mrb[0].mxu0 %v222
    %v569 = vpop.f32.mrb[0].mxu0
    %v570 = vadd.f32 %v89, %v569
    %v571 = vpop.f32.mrb[0].mxu0
    %572 = vmatprep.mubr.f32.mxu0 0.0
    %573 = vmatmul.mubr.f32.gmra.mrb[0].mxu0 %v225
    %v574 = vpop.f32.mrb[0].mxu0
    %v575 = vadd.f32 %v89, %v574
    %v576 = vpop.f32.mrb[0].mxu0
    %577 = vmatprep.mubr.f32.mxu0 0.0
    %578 = vmatmul.mubr.f32.gmra.mrb[0].mxu0 %v228
    %v579 = vpop.f32.mrb[0].mxu0
    %v580 = vadd.f32 %v89, %v579
    %v581 = vpop.f32.mrb[0].mxu0
    %582 = vmatprep.mubr.f32.mxu0 0.0
    %583 = vmatmul.mubr.f32.gmra.mrb[0].mxu0 %v231
    %v584 = vpop.f32.mrb[0].mxu0
    %v585 = vadd.f32 %v89, %v584
    %v586 = vpop.f32.mrb[0].mxu0
    %587 = vmatprep.mubr.f32.mxu0 0.0
    %588 = vmatmul.mubr.f32.gmra.mrb[0].mxu0 %v234
    %v589 = vpop.f32.mrb[0].mxu0
    %v590 = vadd.f32 %v89, %v589
    %v591 = vpop.f32.mrb[0].mxu0
    %592 = vmatprep.mubr.f32.mxu0 0.0
    %593 = vmatmul.mubr.f32.gmra.mrb[0].mxu0 %v237
    %v594 = vpop.f32.mrb[0].mxu0
    %v595 = vadd.f32 %v89, %v594
    %v596 = vpop.f32.mrb[0].mxu0
    %597 = vmatprep.mubr.f32.mxu0 0.0
    %598 = vmatmul.mubr.f32.gmra.mrb[0].mxu0 %v240
    %v599 = vpop.f32.mrb[0].mxu0
    %v600 = vadd.f32 %v89, %v599
    %v601 = vpop.f32.mrb[0].mxu0
    %602 = vmatprep.mubr.f32.mxu0 0.0
    %603 = vmatmul.mubr.f32.gmra.mrb[0].mxu0 %v243
    %v604 = vpop.f32.mrb[0].mxu0
    %v605 = vadd.f32 %v89, %v604
    %v606 = vpop.f32.mrb[0].mxu0
    %607 = vmatprep.mubr.f32.mxu0 0.0
    %608 = vmatmul.mubr.f32.gmra.mrb[0].mxu0 %v246
    %v609 = vpop.f32.mrb[0].mxu0
    %v610 = vadd.f32 %v89, %v609
    %v611 = vpop.f32.mrb[0].mxu0
    %612 = vmatprep.mubr.f32.mxu0 0.0
    %613 = vmatmul.mubr.f32.gmra.mrb[0].mxu0 %v249
    %v614 = vpop.f32.mrb[0].mxu0
    %v615 = vadd.f32 %v89, %v614
    %v616 = vpop.f32.mrb[0].mxu0
    %617 = vmatprep.mubr.f32.mxu0 0.0
    %618 = vmatmul.mubr.f32.gmra.mrb[0].mxu0 %v252
    %v619 = vpop.f32.mrb[0].mxu0
    %v620 = vadd.f32 %v89, %v619
    %v621 = vpop.f32.mrb[0].mxu0
    %622 = vmatprep.mubr.f32.mxu0 0.0
    %623 = vmatmul.mubr.f32.gmra.mrb[0].mxu0 %v255
    %v624 = vpop.f32.mrb[0].mxu0
    %v625 = vadd.f32 %v89, %v624
    %v626 = vpop.f32.mrb[0].mxu0
    %627 = vmatprep.mubr.f32.mxu0 0.0
    %628 = vmatmul.mubr.f32.gmra.mrb[0].mxu0 %v258
    %v629 = vpop.f32.mrb[0].mxu0
    %v630 = vadd.f32 %v89, %v629
    %v631 = vpop.f32.mrb[0].mxu0
    %632 = vmatprep.mubr.f32.mxu0 0.0
    %633 = vmatmul.mubr.f32.gmra.mrb[0].mxu0 %v261
    %v634 = vpop.f32.mrb[0].mxu0
    %v635 = vadd.f32 %v89, %v634
    %v636 = vpop.f32.mrb[0].mxu0
    %637 = vmatprep.mubr.f32.mxu0 0.0
    %638 = vmatmul.mubr.f32.gmra.mrb[0].mxu0 %v264
    %v639 = vpop.f32.mrb[0].mxu0
    %v640 = vadd.f32 %v89, %v639
    %v641 = vpop.f32.mrb[0].mxu0
    %642 = vmatprep.mubr.f32.mxu0 0.0
    %643 = vmatmul.mubr.f32.gmra.mrb[0].mxu0 %v267
    %v644 = vpop.f32.mrb[0].mxu0
    %v645 = vadd.f32 %v89, %v644
    %v646 = vpop.f32.mrb[0].mxu0
    %647 = vmatprep.mubr.f32.mxu0 0.0
    %648 = vmatmul.mubr.f32.gmra.mrb[0].mxu0 %v270
    %v649 = vpop.f32.mrb[0].mxu0
    %v650 = vadd.f32 %v89, %v649
    %v651 = vpop.f32.mrb[0].mxu0
    %652 = vmatprep.mubr.f32.mxu0 0.0
    %653 = vmatmul.mubr.f32.gmra.mrb[0].mxu0 %v273
    %v654 = vpop.f32.mrb[0].mxu0
    %v655 = vadd.f32 %v89, %v654
    %v656 = vpop.f32.mrb[0].mxu0
    %657 = vmatprep.mubr.f32.mxu0 0.0
    %658 = vmatmul.mubr.f32.gmra.mrb[0].mxu0 %v276
    %v659 = vpop.f32.mrb[0].mxu0
    %v660 = vadd.f32 %v89, %v659
    %v661 = vpop.f32.mrb[0].mxu0
    %662 = vmatprep.mubr.f32.mxu0 0.0
    %663 = vmatmul.mubr.f32.gmra.mrb[0].mxu0 %v279
    %v664 = vpop.f32.mrb[0].mxu0
    %v665 = vadd.f32 %v89, %v664
    %v666 = vpop.f32.mrb[0].mxu0
    %667 = vmatprep.mubr.f32.mxu0 0.0
    %668 = vmatmul.mubr.f32.gmra.mrb[0].mxu0 %v282
    %v669 = vpop.f32.mrb[0].mxu0
    %v670 = vadd.f32 %v89, %v669
    %v671 = vpop.f32.mrb[0].mxu0
    %672 = vdwg.mxu0
    %v673 = vmax.f32 %v355, 0.0
    %v674 = vmax.f32 %v360, 0.0
    %v675 = vmax.f32 %v365, 0.0
    %v676 = vmax.f32 %v370, 0.0
    %v677 = vmax.f32 %v375, 0.0
    %v678 = vmax.f32 %v380, 0.0
    %v679 = vmax.f32 %v385, 0.0
    %v680 = vmax.f32 %v390, 0.0
    %v681 = vmax.f32 %v395, 0.0
    %v682 = vmax.f32 %v400, 0.0
    %v683 = vmax.f32 %v405, 0.0
    %v684 = vmax.f32 %v410, 0.0
    %v685 = vmax.f32 %v415, 0.0
    %v686 = vmax.f32 %v420, 0.0
    %v687 = vmax.f32 %v425, 0.0
    %v688 = vmax.f32 %v430, 0.0
    %v689 = vmax.f32 %v435, 0.0
    %v690 = vmax.f32 %v440, 0.0
    %v691 = vmax.f32 %v445, 0.0
    %v692 = vmax.f32 %v450, 0.0
    %v693 = vmax.f32 %v455, 0.0
    %v694 = vmax.f32 %v460, 0.0
    %v695 = vmax.f32 %v465, 0.0
    %v696 = vmax.f32 %v470, 0.0
    %v697 = vmax.f32 %v475, 0.0
    %v698 = vmax.f32 %v480, 0.0
    %v699 = vmax.f32 %v485, 0.0
    %v700 = vmax.f32 %v490, 0.0
    %v701 = vmax.f32 %v495, 0.0
    %v702 = vmax.f32 %v500, 0.0
    %v703 = vmax.f32 %v505, 0.0
    %v704 = vmax.f32 %v510, 0.0
    %v705 = vmax.f32 %v515, 0.0
    %v706 = vmax.f32 %v520, 0.0
    %v707 = vmax.f32 %v525, 0.0
    %v708 = vmax.f32 %v530, 0.0
    %v709 = vmax.f32 %v535, 0.0
    %v710 = vmax.f32 %v540, 0.0
    %v711 = vmax.f32 %v545, 0.0
    %v712 = vmax.f32 %v550, 0.0
    %v713 = vmax.f32 %v555, 0.0
    %v714 = vmax.f32 %v560, 0.0
    %v715 = vmax.f32 %v565, 0.0
    %v716 = vmax.f32 %v570, 0.0
    %v717 = vmax.f32 %v575, 0.0
    %v718 = vmax.f32 %v580, 0.0
    %v719 = vmax.f32 %v585, 0.0
    %v720 = vmax.f32 %v590, 0.0
    %v721 = vmax.f32 %v595, 0.0
    %v722 = vmax.f32 %v600, 0.0
    %v723 = vmax.f32 %v605, 0.0
    %v724 = vmax.f32 %v610, 0.0
    %v725 = vmax.f32 %v615, 0.0
    %v726 = vmax.f32 %v620, 0.0
    %v727 = vmax.f32 %v625, 0.0
    %v728 = vmax.f32 %v630, 0.0
    %v729 = vmax.f32 %v635, 0.0
    %v730 = vmax.f32 %v640, 0.0
    %v731 = vmax.f32 %v645, 0.0
    %v732 = vmax.f32 %v650, 0.0
    %v733 = vmax.f32 %v655, 0.0
    %v734 = vmax.f32 %v660, 0.0
    %v735 = vmax.f32 %v665, 0.0
    %v736 = vmax.f32 %v670, 0.0
    %737 = vst [vmem:[#allocation2] sm:$0xff] %v673
    %738 = vst [vmem:[#allocation2 + $0x8] sm:$0xff] %v674
    %739 = vst [vmem:[#allocation2 + $0x10] sm:$0xff] %v675
    %740 = vst [vmem:[#allocation2 + $0x18] sm:$0xff] %v676
    %741 = vst [vmem:[#allocation2 + $0x20] sm:$0xff] %v677
    %742 = vst [vmem:[#allocation2 + $0x28] sm:$0xff] %v678
    %743 = vst [vmem:[#allocation2 + $0x30] sm:$0xff] %v679
    %744 = vst [vmem:[#allocation2 + $0x38] sm:$0xff] %v680
    %745 = vst [vmem:[#allocation2 + $0x40] sm:$0xff] %v681
    %746 = vst [vmem:[#allocation2 + $0x48] sm:$0xff] %v682
    %747 = vst [vmem:[#allocation2 + $0x50] sm:$0xff] %v683
    %748 = vst [vmem:[#allocation2 + $0x58] sm:$0xff] %v684
    %749 = vst [vmem:[#allocation2 + $0x60] sm:$0xff] %v685
    %750 = vst [vmem:[#allocation2 + $0x68] sm:$0xff] %v686
    %751 = vst [vmem:[#allocation2 + $0x70] sm:$0xff] %v687
    %752 = vst [vmem:[#allocation2 + $0x78] sm:$0xff] %v688
    %753 = vst [vmem:[#allocation2 + $0x80] sm:$0xff] %v689
    %754 = vst [vmem:[#allocation2 + $0x88] sm:$0xff] %v690
    %755 = vst [vmem:[#allocation2 + $0x90] sm:$0xff] %v691
    %756 = vst [vmem:[#allocation2 + $0x98] sm:$0xff] %v692
    %757 = vst [vmem:[#allocation2 + $0xa0] sm:$0xff] %v693
    %758 = vst [vmem:[#allocation2 + $0xa8] sm:$0xff] %v694
    %759 = vst [vmem:[#allocation2 + $0xb0] sm:$0xff] %v695
    %760 = vst [vmem:[#allocation2 + $0xb8] sm:$0xff] %v696
    %761 = vst [vmem:[#allocation2 + $0xc0] sm:$0xff] %v697
    %762 = vst [vmem:[#allocation2 + $0xc8] sm:$0xff] %v698
    %763 = vst [vmem:[#allocation2 + $0xd0] sm:$0xff] %v699
    %764 = vst [vmem:[#allocation2 + $0xd8] sm:$0xff] %v700
    %765 = vst [vmem:[#allocation2 + $0xe0] sm:$0xff] %v701
    %766 = vst [vmem:[#allocation2 + $0xe8] sm:$0xff] %v702
    %767 = vst [vmem:[#allocation2 + $0xf0] sm:$0xff] %v703
    %768 = vst [vmem:[#allocation2 + $0xf8] sm:$0xff] %v704
    %769 = vst [vmem:[#allocation2 + $0x100] sm:$0xff] %v705
    %770 = vst [vmem:[#allocation2 + $0x108] sm:$0xff] %v706
    %771 = vst [vmem:[#allocation2 + $0x110] sm:$0xff] %v707
    %772 = vst [vmem:[#allocation2 + $0x118] sm:$0xff] %v708
    %773 = vst [vmem:[#allocation2 + $0x120] sm:$0xff] %v709
    %774 = vst [vmem:[#allocation2 + $0x128] sm:$0xff] %v710
    %775 = vst [vmem:[#allocation2 + $0x130] sm:$0xff] %v711
    %776 = vst [vmem:[#allocation2 + $0x138] sm:$0xff] %v712
    %777 = vst [vmem:[#allocation2 + $0x140] sm:$0xff] %v713
    %778 = vst [vmem:[#allocation2 + $0x148] sm:$0xff] %v714
    %779 = vst [vmem:[#allocation2 + $0x150] sm:$0xff] %v715
    %780 = vst [vmem:[#allocation2 + $0x158] sm:$0xff] %v716
    %781 = vst [vmem:[#allocation2 + $0x160] sm:$0xff] %v717
    %782 = vst [vmem:[#allocation2 + $0x168] sm:$0xff] %v718
    %783 = vst [vmem:[#allocation2 + $0x170] sm:$0xff] %v719
    %784 = vst [vmem:[#allocation2 + $0x178] sm:$0xff] %v720
    %785 = vst [vmem:[#allocation2 + $0x180] sm:$0xff] %v721
    %786 = vst [vmem:[#allocation2 + $0x188] sm:$0xff] %v722
    %787 = vst [vmem:[#allocation2 + $0x190] sm:$0xff] %v723
    %788 = vst [vmem:[#allocation2 + $0x198] sm:$0xff] %v724
    %789 = vst [vmem:[#allocation2 + $0x1a0] sm:$0xff] %v725
    %790 = vst [vmem:[#allocation2 + $0x1a8] sm:$0xff] %v726
    %791 = vst [vmem:[#allocation2 + $0x1b0] sm:$0xff] %v727
    %792 = vst [vmem:[#allocation2 + $0x1b8] sm:$0xff] %v728
    %793 = vst [vmem:[#allocation2 + $0x1c0] sm:$0xff] %v729
    %794 = vst [vmem:[#allocation2 + $0x1c8] sm:$0xff] %v730
    %795 = vst [vmem:[#allocation2 + $0x1d0] sm:$0xff] %v731
    %796 = vst [vmem:[#allocation2 + $0x1d8] sm:$0xff] %v732
    %797 = vst [vmem:[#allocation2 + $0x1e0] sm:$0xff] %v733
    %798 = vst [vmem:[#allocation2 + $0x1e8] sm:$0xff] %v734
    %799 = vst [vmem:[#allocation2 + $0x1f0] sm:$0xff] %v735
    %800 = vst [vmem:[#allocation2 + $0x1f8] sm:$0xff] %v736
    // Predicated region
    $region14: #{tpu_custom_call.1} parent=1 // pred_check
      _
    $region15: #{tpu_custom_call.1} parent=1 // pred_check_branch
      %802 = sbr.rel (0) target = $region17
    $region16: #{tpu_custom_call.1} parent=1 // pred_region
      %s804 = ssub.s32 8192, 8192
      %805 = vsyncadd [#allocation3], %s804
      %s806 = sshll.u32 [#allocation2], 4
      %s807 = int_to_ptr.vmem [resolvable:$true] %s806
      %812 = dma.vmem_to_hbm [thread:$0]  %s807, 8192, %s3, [#allocation3], 128, 128, 8
    $region17: #{tpu_custom_call.1} parent=1 // pred_fallthru
      _
    // Predicated region
    $region18: #{tpu_custom_call.1} parent=1 // pred_check
      _
    $region19: #{tpu_custom_call.1} parent=1 // pred_check_branch
      %814 = sbr.rel (0) target = $region21
    $region20: #{tpu_custom_call.1} parent=1 // pred_region
      %815 = dma.done [#allocation3], 8192
    $region21: #{tpu_custom_call.1} parent=1 // pred_fallthru
      _
    %816 = vsyncpa [#allocation3], 1

</llo_original>
